<compile_context>
chip_gen: v5e
topology: v5e:2x2
jax: 0.10.0
libtpu: 0.0.40
codegen_flags: <defaults>
</compile_context>

<pallas_src>
import math

import jax
import jax.numpy as jnp
from jax.experimental import pallas as pl
from jax.experimental.pallas import tpu as pltpu


def _round_up(x, m):
    return (x + m - 1) // m * m


def _make_mlp_kernel(compute_dtype, approximate_gelu):
    def kernel(x_ref, w1_ref, b1_ref, w2_ref, b2_ref, o_ref):
        # x_ref:  (tm, C_in)   token rows in their original dtype (cast here, in VMEM,
        #                      instead of a separate XLA pad/convert pass over HBM)
        # w1_ref: (C_in, Hp)   fc1 weight, (in x out) layout, compute_dtype, single-buffered
        # b1_ref: (1, Hp)      fc1 bias, f32
        # w2_ref: (Hp, C_out)  fc2 weight, (in x out) layout, compute_dtype, single-buffered
        # b2_ref: (1, C_out)   fc2 bias, f32
        # o_ref:  (tm, C_out)
        x = x_ref[...].astype(compute_dtype)
        # fc1: bf16 MXU matmul, f32 accumulate, f32 bias add
        h = jnp.dot(x, w1_ref[...], preferred_element_type=jnp.float32) + b1_ref[...]
        # drop=0.0 -> both Dropout calls in the module are the identity.
        h = jax.nn.gelu(h, approximate=approximate_gelu)
        h = h.astype(compute_dtype)  # back to bf16 for the second MXU pass
        y = jnp.dot(h, w2_ref[...], preferred_element_type=jnp.float32) + b2_ref[...]
        o_ref[...] = y.astype(o_ref.dtype)

    return kernel


def prepare_mlp_params(w1, b1, w2, b2, *, compute_dtype=jnp.bfloat16):
    """One-time (hoistable/cacheable) parameter prep.

    Pads the hidden dim H to a multiple of 128 and casts weights to the MXU
    compute dtype.  Weights are stored (in, out), i.e. PyTorch weight.T, so
    x @ w == F.linear(x, weight).  Padded hidden columns carry zero weight and
    bias, so gelu(0)=0 flows through zero rows of w2 -> numerics unchanged.
    """
    C_in, H = w1.shape
    C_out = w2.shape[1]
    Hp = _round_up(H, 128)
    w1p = jnp.pad(w1, ((0, 0), (0, Hp - H))).astype(compute_dtype)
    w2p = jnp.pad(w2, ((0, Hp - H), (0, 0))).astype(compute_dtype)
    b1p = jnp.pad(b1, (0, Hp - H)).reshape(1, Hp).astype(jnp.float32)
    b2p = b2.reshape(1, C_out).astype(jnp.float32)
    return w1p, b1p, w2p, b2p


def _vmem_capacity_and_budget():
    vmem_capacity = 64 << 20  # conservative fallback (v7x per-core VMEM)
    try:
        vmem_capacity = int(pltpu.get_tpu_info().vmem_capacity_bytes)
    except Exception:
        pass
    headroom = 16 << 20  # Mosaic internal scratch / safety
    budget = min(100 << 20, max(vmem_capacity - headroom, (vmem_capacity * 3) // 4))
    return vmem_capacity, budget


def mlp_pallas(x, params, *, tile_rows=None, compute_dtype=jnp.bfloat16,
               approximate_gelu=True, out_dtype=None, drop=0.0):
    """x: (..., C_in); params = prepare_mlp_params(w1, b1, w2, b2)."""
    if drop != 0.0:
        # TODO(synk): implement dropout masking with pltpu.prng_seed / prng_random_bits.
        raise NotImplementedError("mlp_pallas implements the module default drop=0.0 only")

    w1p, b1p, w2p, b2p = params
    C_in, Hp = w1p.shape
    C_out = w2p.shape[1]
    assert x.shape[-1] == C_in
    lead = x.shape[:-1]
    M = math.prod(lead)
    out_dtype = x.dtype if out_dtype is None else out_dtype  # pass bf16 to halve writeback

    x2 = x.reshape(M, C_in)  # metadata-only reshape: no pad, no cast, no extra HBM pass

    x_isz = jnp.dtype(x.dtype).itemsize
    o_isz = jnp.dtype(out_dtype).itemsize
    c_isz = jnp.dtype(compute_dtype).itemsize

    vmem_capacity, vmem_budget = _vmem_capacity_and_budget()

    def footprint(tm):
        weights = (C_in * Hp + Hp * C_out) * c_isz + (Hp + C_out) * 4    # single-buffered
        streamed = 2 * tm * C_in * x_isz + 2 * tm * C_out * o_isz        # double-buffered x / out
        interm = tm * Hp * (4 + c_isz) + tm * C_out * 4                  # f32 + bf16 h, f32 y
        return weights + streamed + interm + (2 << 20)                   # + slack

    # Per-generation default row tile: 512 on 128-MiB-VMEM parts (v5e/v6e), 256 on v7x.
    if tile_rows is None:
        tile_rows = 256 if vmem_capacity <= (64 << 20) else 512
    tm = _round_up(max(int(tile_rows), 128), 128)
    tm = min(tm, _round_up(M, 128))
    if M > 128:
        # Keep >= 2 grid steps so the "parallel" row axis can feed both v7x TensorCores.
        tm = min(tm, max(128, _round_up((M + 1) // 2, 128)))
    while tm > 128 and footprint(tm) > vmem_budget:
        tm -= 128
    # TODO(synk): for very large hidden dims (H >= ~4k) add an "arbitrary" Hp-chunk grid
    # axis with an f32 accumulator so resident weights / the (tm, Hp) intermediate stay
    # under v7x's 64 MiB VMEM.

    n_row_tiles = pl.cdiv(M, tm)

    # Grid-invariant operands: single buffer -> no wasted double-buffer VMEM.
    def resident(shape):
        return pl.BlockSpec(shape, lambda i: (0, 0),
                            pipeline_mode=pl.Buffered(buffer_count=1))

    out = pl.pallas_call(
        _make_mlp_kernel(compute_dtype, approximate_gelu),
        out_shape=jax.ShapeDtypeStruct((M, C_out), out_dtype),
        grid_spec=pltpu.PrefetchScalarGridSpec(
            num_scalar_prefetch=0,
            grid=(n_row_tiles,),
            in_specs=[
                pl.BlockSpec((tm, C_in), lambda i: (i, 0)),   # streamed token rows
                resident((C_in, Hp)),                          # w1
                resident((1, Hp)),                             # b1
                resident((Hp, C_out)),                         # w2
                resident((1, C_out)),                          # b2
            ],
            out_specs=pl.BlockSpec((tm, C_out), lambda i: (i, 0)),
        ),
        compiler_params=pltpu.CompilerParams(
            dimension_semantics=("parallel",),   # lets v7x shard row tiles across its 2 TCs
            vmem_limit_bytes=int(vmem_budget),
        ),
    )(x2, w1p, b1p, w2p, b2p)

    return out.reshape(*lead, C_out)


def mlp_reference(x, w1, b1, w2, b2):
    h = jnp.dot(x, w1) + b1
    h = jax.nn.gelu(h, approximate=False)   # PyTorch nn.GELU() default (exact erf)
    return jnp.dot(h, w2) + b2


if __name__ == "__main__":
    key = jax.random.PRNGKey(0)
    B, N = 2, 128                  # batch, tokens (e.g. Swin window tokens)
    C_in, H, C_out = 32, 64, 32    # in_features, hidden_features, out_features

    k1, k2, k3, k4, k5 = jax.random.split(key, 5)
    x = jax.random.normal(k1, (B, N, C_in), dtype=jnp.float32)
    # Deterministic synthetic parameters stored as (in, out) == PyTorch weight.T.
    w1 = jax.random.normal(k2, (C_in, H), dtype=jnp.float32) * 0.05
    b1 = jax.random.normal(k3, (H,), dtype=jnp.float32) * 0.05
    w2 = jax.random.normal(k4, (H, C_out), dtype=jnp.float32) * 0.05
    b2 = jax.random.normal(k5, (C_out,), dtype=jnp.float32) * 0.05

    # One-time parameter prep (pad H to 128 / cast to bf16), hoisted out of the call path.
    params = prepare_mlp_params(w1, b1, w2, b2)

    y = mlp_pallas(x, params)
    jax.block_until_ready(y)

    y_ref = mlp_reference(x, w1, b1, w2, b2)
    assert y.shape == y_ref.shape
    # bf16 MXU inputs (f32 accumulate) + tanh-approx GELU vs the exact-erf f32 reference.
    assert jnp.allclose(y, y_ref, atol=1e-2, rtol=1e-2), "mismatch vs reference"

    print("KERNEL_OK")
</pallas_src>

<mosaic_0001>
module attributes {stable_mosaic.version = 11 : i64} {
  func.func @kernel(%arg0: i32, %arg1: memref<128x32xf32, #tpu.memory_space<vmem>>, %arg2: memref<32x128xbf16, #tpu.memory_space<vmem>>, %arg3: memref<1x128xf32, #tpu.memory_space<vmem>>, %arg4: memref<128x32xbf16, #tpu.memory_space<vmem>>, %arg5: memref<1x32xf32, #tpu.memory_space<vmem>>, %arg6: memref<128x32xf32, #tpu.memory_space<vmem>>) attributes {dimension_semantics = [#tpu.dimension_semantics<parallel>], iteration_bounds = array<i64: 2>, scalar_prefetch = 0 : i64, scratch_operands = 0 : i64, tpu.core_type = #tpu.core_type<tc>, window_params = [{transform_indices = @transform_0, window_bounds = array<i64: 128, 32>}, {pipeline_mode = #tpu.pipeline_mode<synchronous>, transform_indices = @transform_1, window_bounds = array<i64: 32, 128>}, {pipeline_mode = #tpu.pipeline_mode<synchronous>, transform_indices = @transform_2, window_bounds = array<i64: 1, 128>}, {pipeline_mode = #tpu.pipeline_mode<synchronous>, transform_indices = @transform_3, window_bounds = array<i64: 128, 32>}, {pipeline_mode = #tpu.pipeline_mode<synchronous>, transform_indices = @transform_4, window_bounds = array<i64: 1, 32>}, {transform_indices = @transform_5, window_bounds = array<i64: 128, 32>}]} {
    %c0 = arith.constant 0 : index
    %c0_0 = arith.constant 0 : index
    %0 = vector.load %arg1[%c0, %c0_0] : memref<128x32xf32, #tpu.memory_space<vmem>>, vector<128x32xf32>
    %1 = arith.truncf %0 : vector<128x32xf32> to vector<128x32xbf16>
    %c0_1 = arith.constant 0 : index
    %c0_2 = arith.constant 0 : index
    %2 = vector.load %arg2[%c0_1, %c0_2] : memref<32x128xbf16, #tpu.memory_space<vmem>>, vector<32x128xbf16>
    %cst = arith.constant dense<0.000000e+00> : vector<128x128xf32>
    %3 = tpu.matmul %1, %2, %cst {dimension_numbers = #tpu.dot_dimension_numbers<[1], [0], [0], [1], [0, 0, 1, 1], [], []>} : vector<128x32xbf16>, vector<32x128xbf16>, vector<128x128xf32> -> vector<128x128xf32>
    %c0_3 = arith.constant 0 : index
    %c0_4 = arith.constant 0 : index
    %4 = vector.load %arg3[%c0_3, %c0_4] : memref<1x128xf32, #tpu.memory_space<vmem>>, vector<1x128xf32>
    %5 = vector.broadcast %4 : vector<1x128xf32> to vector<128x128xf32>
    %6 = arith.addf %3, %5 : vector<128x128xf32>
    %7 = arith.mulf %6, %6 : vector<128x128xf32>
    %8 = arith.mulf %6, %7 : vector<128x128xf32>
    %cst_5 = arith.constant 4.471500e-02 : f32
    %9 = vector.broadcast %cst_5 : f32 to vector<128x128xf32>
    %10 = arith.mulf %9, %8 : vector<128x128xf32>
    %11 = arith.addf %6, %10 : vector<128x128xf32>
    %cst_6 = arith.constant 0.797884583 : f32
    %12 = vector.broadcast %cst_6 : f32 to vector<128x128xf32>
    %13 = arith.mulf %12, %11 : vector<128x128xf32>
    %14 = math.tanh %13 : vector<128x128xf32>
    %cst_7 = arith.constant 1.000000e+00 : f32
    %15 = vector.broadcast %cst_7 : f32 to vector<128x128xf32>
    %16 = arith.addf %15, %14 : vector<128x128xf32>
    %cst_8 = arith.constant 5.000000e-01 : f32
    %17 = vector.broadcast %cst_8 : f32 to vector<128x128xf32>
    %18 = arith.mulf %17, %16 : vector<128x128xf32>
    %19 = arith.mulf %6, %18 : vector<128x128xf32>
    %20 = arith.truncf %19 : vector<128x128xf32> to vector<128x128xbf16>
    %c0_9 = arith.constant 0 : index
    %c0_10 = arith.constant 0 : index
    %21 = vector.load %arg4[%c0_9, %c0_10] : memref<128x32xbf16, #tpu.memory_space<vmem>>, vector<128x32xbf16>
    %cst_11 = arith.constant dense<0.000000e+00> : vector<128x32xf32>
    %22 = tpu.matmul %20, %21, %cst_11 {dimension_numbers = #tpu.dot_dimension_numbers<[1], [0], [0], [1], [0, 0, 1, 1], [], []>} : vector<128x128xbf16>, vector<128x32xbf16>, vector<128x32xf32> -> vector<128x32xf32>
    %c0_12 = arith.constant 0 : index
    %c0_13 = arith.constant 0 : index
    %23 = vector.load %arg5[%c0_12, %c0_13] : memref<1x32xf32, #tpu.memory_space<vmem>>, vector<1x32xf32>
    %24 = vector.broadcast %23 : vector<1x32xf32> to vector<128x32xf32>
    %25 = arith.addf %22, %24 : vector<128x32xf32>
    %c0_14 = arith.constant 0 : index
    %c0_15 = arith.constant 0 : index
    %26 = vector.load %arg6[%c0_14, %c0_15] : memref<128x32xf32, #tpu.memory_space<vmem>>, vector<128x32xf32>
    tpu.vector_store %arg6[%c0_14, %c0_15], %25 {strides = array<i32>} : memref<128x32xf32, #tpu.memory_space<vmem>>, vector<128x32xf32>,
    return
  }
  func.func @transform_0(%arg0: i32) -> (i32, i32) {
    %c0_i32 = arith.constant 0 : i32
    %c0_i32_0 = arith.constant 0 : i32
    return %arg0, %c0_i32 : i32, i32
  }
  func.func @transform_1(%arg0: i32) -> (i32, i32) {
    %c0_i32 = arith.constant 0 : i32
    %c0_i32_0 = arith.constant 0 : i32
    %c0_i32_1 = arith.constant 0 : i32
    return %c0_i32, %c0_i32_0 : i32, i32
  }
  func.func @transform_2(%arg0: i32) -> (i32, i32) {
    %c0_i32 = arith.constant 0 : i32
    %c0_i32_0 = arith.constant 0 : i32
    %c0_i32_1 = arith.constant 0 : i32
    return %c0_i32, %c0_i32_0 : i32, i32
  }
  func.func @transform_3(%arg0: i32) -> (i32, i32) {
    %c0_i32 = arith.constant 0 : i32
    %c0_i32_0 = arith.constant 0 : i32
    %c0_i32_1 = arith.constant 0 : i32
    return %c0_i32, %c0_i32_0 : i32, i32
  }
  func.func @transform_4(%arg0: i32) -> (i32, i32) {
    %c0_i32 = arith.constant 0 : i32
    %c0_i32_0 = arith.constant 0 : i32
    %c0_i32_1 = arith.constant 0 : i32
    return %c0_i32, %c0_i32_0 : i32, i32
  }
  func.func @transform_5(%arg0: i32) -> (i32, i32) {
    %c0_i32 = arith.constant 0 : i32
    %c0_i32_0 = arith.constant 0 : i32
    return %arg0, %c0_i32 : i32, i32
  }
}

</mosaic_0001>

<llo_original>
// kernel: tpu_custom_call.1
$region0: #{tpu_custom_call.1}
  #allocation0 [shape = 'u32[]', space=smem, size = 0x4, offset = 0x4, fixed_abs, tag = 'smem constant byte address 0x4 - core index']
  #allocation1 [shape = 'u32[72,128]{1,0:T(1,128)}', space=vmem, size = 0x9000, scoped, tag = 'internal scratch']
  %s0 = inlined_call_operand.vmem [shape: f32[256,32], index: 0, kind: input, shape index: {}]
  %s1 = inlined_call_operand.vmem [shape: bf16[32,128], index: 1, kind: input, shape index: {}]
  %s2 = inlined_call_operand.vmem [shape: f32[1,128], index: 2, kind: input, shape index: {}]
  %s3 = inlined_call_operand.vmem [shape: bf16[128,32], index: 3, kind: input, shape index: {}]
  %s4 = inlined_call_operand.vmem [shape: f32[1,32], index: 4, kind: input, shape index: {}]
  %s5 = inlined_call_operand.vmem [shape: f32[256,32], index: 5, kind: output, shape index: {}]
  %s6 = sld [smem:[#allocation0]]
  $region53: #{tpu_custom_call.1} parent=0
    _
  %s8 = ssub.s32 1, %s6
  %s9 = scalar_select 0, %s8, %s6
  loop: start=0, step=1, limit=4
  $region2: #{tpu_custom_call.1} parent=0 // loop_pre_header
    _
  $region3: #{tpu_custom_call.1} parent=0 // loop_header
    %s11 = sphi 0, %s15
    %p12 = scmp.ge.s32.totalorder %s11, 4
    %s21 = sphi 0, %s23
    %s24 = sphi 0, %s21
    %s25 = sphi 0, %s24
    %s41 = sphi 0, %s25
    %s45 = sphi 0, %s45
    %s47 = sphi 0, %s45
    %s48 = sphi 0, %s47
    %s62 = sphi 0, %s48
    %s66 = sphi 0, %s66
    %s68 = sphi 0, %s66
    %s69 = sphi 0, %s68
    %s83 = sphi 0, %s69
    %s87 = sphi 0, %s87
    %s89 = sphi 0, %s87
    %s90 = sphi 0, %s89
    %s104 = sphi 0, %s90
    %s108 = sphi 0, %s108
    %s110 = sphi 0, %s108
    %s111 = sphi 0, %s110
    %s125 = sphi 0, %s111
    %s131 = sphi 0, %s133
    %s134 = sphi 0, %s131
    %s135 = sphi 0, %s134
    %s151 = sphi 0, %s135
  $region4: #{tpu_custom_call.1} parent=0 // loop_header_branch
    %14 = sbr.rel (%p12) target = $region8
  $region5: #{tpu_custom_call.1} parent=0 // loop_body
    %s16 = ssub.s32 %s11, 1
    %s17 = ssub.s32 %s11, 2
    %s18 = sadd.s32 %s11, 1
    %s19 = ssub.s32 %s11, %s18
    %p20 = scmp.eq.s32.totalorder %s19, 0
    %s22 = sadd.s32 %s21, 1
    %s23 = scalar_select %p20, %s21, %s22
    %p26 = pneg %p20
    %p27 = scmp.eq.s32.totalorder %s11, 1
    %p28 = por %p26, %p27
    %p29 = scmp.ne.s32.totalorder %s21, %s24
    %p30 = scmp.eq.s32.totalorder %s11, 0
    %p31 = por %p29, %p30
    %p32 = scmp.ne.s32.totalorder %s21, %s24
    %p33 = scmp.eq.s32.totalorder %s16, 1
    %p34 = por %p32, %p33
    %p35 = scmp.ne.s32.totalorder %s24, %s25
    %p36 = scmp.eq.s32.totalorder %s16, 0
    %p37 = por %p35, %p36
    %p38 = scmp.ne.s32.totalorder %s24, %s25
    %p39 = scmp.eq.s32.totalorder %s17, 1
    %p40 = por %p38, %p39
    %p42 = scmp.ne.s32.totalorder %s25, %s41
    %p43 = scmp.eq.s32.totalorder %s17, 0
    %p44 = por %p42, %p43
    %s46 = sadd.s32 %s45, 1
    %p49 = scmp.eq.s32.totalorder %s11, 1
    %p50 = scmp.ne.s32.totalorder %s45, %s47
    %p51 = scmp.eq.s32.totalorder %s11, 0
    %p52 = por %p50, %p51
    %p53 = scmp.ne.s32.totalorder %s45, %s47
    %p54 = scmp.eq.s32.totalorder %s16, 1
    %p55 = por %p53, %p54
    %p56 = scmp.ne.s32.totalorder %s47, %s48
    %p57 = scmp.eq.s32.totalorder %s16, 0
    %p58 = por %p56, %p57
    %p59 = scmp.ne.s32.totalorder %s47, %s48
    %p60 = scmp.eq.s32.totalorder %s17, 1
    %p61 = por %p59, %p60
    %p63 = scmp.ne.s32.totalorder %s48, %s62
    %p64 = scmp.eq.s32.totalorder %s17, 0
    %p65 = por %p63, %p64
    %s67 = sadd.s32 %s66, 1
    %p70 = scmp.eq.s32.totalorder %s11, 1
    %p71 = scmp.ne.s32.totalorder %s66, %s68
    %p72 = scmp.eq.s32.totalorder %s11, 0
    %p73 = por %p71, %p72
    %p74 = scmp.ne.s32.totalorder %s66, %s68
    %p75 = scmp.eq.s32.totalorder %s16, 1
    %p76 = por %p74, %p75
    %p77 = scmp.ne.s32.totalorder %s68, %s69
    %p78 = scmp.eq.s32.totalorder %s16, 0
    %p79 = por %p77, %p78
    %p80 = scmp.ne.s32.totalorder %s68, %s69
    %p81 = scmp.eq.s32.totalorder %s17, 1
    %p82 = por %p80, %p81
    %p84 = scmp.ne.s32.totalorder %s69, %s83
    %p85 = scmp.eq.s32.totalorder %s17, 0
    %p86 = por %p84, %p85
    %s88 = sadd.s32 %s87, 1
    %p91 = scmp.eq.s32.totalorder %s11, 1
    %p92 = scmp.ne.s32.totalorder %s87, %s89
    %p93 = scmp.eq.s32.totalorder %s11, 0
    %p94 = por %p92, %p93
    %p95 = scmp.ne.s32.totalorder %s87, %s89
    %p96 = scmp.eq.s32.totalorder %s16, 1
    %p97 = por %p95, %p96
    %p98 = scmp.ne.s32.totalorder %s89, %s90
    %p99 = scmp.eq.s32.totalorder %s16, 0
    %p100 = por %p98, %p99
    %p101 = scmp.ne.s32.totalorder %s89, %s90
    %p102 = scmp.eq.s32.totalorder %s17, 1
    %p103 = por %p101, %p102
    %p105 = scmp.ne.s32.totalorder %s90, %s104
    %p106 = scmp.eq.s32.totalorder %s17, 0
    %p107 = por %p105, %p106
    %s109 = sadd.s32 %s108, 1
    %p112 = scmp.eq.s32.totalorder %s11, 1
    %p113 = scmp.ne.s32.totalorder %s108, %s110
    %p114 = scmp.eq.s32.totalorder %s11, 0
    %p115 = por %p113, %p114
    %p116 = scmp.ne.s32.totalorder %s108, %s110
    %p117 = scmp.eq.s32.totalorder %s16, 1
    %p118 = por %p116, %p117
    %p119 = scmp.ne.s32.totalorder %s110, %s111
    %p120 = scmp.eq.s32.totalorder %s16, 0
    %p121 = por %p119, %p120
    %p122 = scmp.ne.s32.totalorder %s110, %s111
    %p123 = scmp.eq.s32.totalorder %s17, 1
    %p124 = por %p122, %p123
    %p126 = scmp.ne.s32.totalorder %s111, %s125
    %p127 = scmp.eq.s32.totalorder %s17, 0
    %p128 = por %p126, %p127
    %s129 = ssub.s32 %s11, %s18
    %p130 = scmp.eq.s32.totalorder %s129, 0
    %s132 = sadd.s32 %s131, 1
    %s133 = scalar_select %p130, %s131, %s132
    %p136 = pneg %p130
    %p137 = scmp.eq.s32.totalorder %s11, 1
    %p138 = por %p136, %p137
    %p139 = scmp.ne.s32.totalorder %s131, %s134
    %p140 = scmp.eq.s32.totalorder %s11, 0
    %p141 = por %p139, %p140
    %p142 = scmp.ne.s32.totalorder %s131, %s134
    %p143 = scmp.eq.s32.totalorder %s16, 1
    %p144 = por %p142, %p143
    %p145 = scmp.ne.s32.totalorder %s134, %s135
    %p146 = scmp.eq.s32.totalorder %s16, 0
    %p147 = por %p145, %p146
    %p148 = scmp.ne.s32.totalorder %s134, %s135
    %p149 = scmp.eq.s32.totalorder %s17, 1
    %p150 = por %p148, %p149
    %p152 = scmp.ne.s32.totalorder %s135, %s151
    %p153 = scmp.eq.s32.totalorder %s17, 0
    %p154 = por %p152, %p153
    %p155 = scmp.le.s32.totalorder 1, %s11
    %p156 = scmp.lt.s32.totalorder %s11, 3
    %p157 = pnand %p155, %p156
    %p158 = pneg %p157
    // Predicated region
    $region9: #{tpu_custom_call.1} parent=5 // pred_check
      _
    $region10: #{tpu_custom_call.1} parent=5 // pred_check_branch
      %160 = sbr.rel (%p157) target = $region12
    $region11: #{tpu_custom_call.1} parent=5 // pred_region
      %s161 = ssub.s32 %s11, 1
      // Predicated region
      $region13: #{tpu_custom_call.1} parent=11 // pred_check
        %p162 = pneg %p58
      $region14: #{tpu_custom_call.1} parent=11 // pred_check_branch
        %164 = sbr.rel (%p162) target = $region16
      $region15: #{tpu_custom_call.1} parent=11 // pred_region
        _
      $region16: #{tpu_custom_call.1} parent=11 // pred_fallthru
        _
      // Predicated region
      $region17: #{tpu_custom_call.1} parent=11 // pred_check
        %p165 = pneg %p79
      $region18: #{tpu_custom_call.1} parent=11 // pred_check_branch
        %167 = sbr.rel (%p165) target = $region20
      $region19: #{tpu_custom_call.1} parent=11 // pred_region
        _
      $region20: #{tpu_custom_call.1} parent=11 // pred_fallthru
        _
      // Predicated region
      $region21: #{tpu_custom_call.1} parent=11 // pred_check
        %p168 = pneg %p100
      $region22: #{tpu_custom_call.1} parent=11 // pred_check_branch
        %170 = sbr.rel (%p168) target = $region24
      $region23: #{tpu_custom_call.1} parent=11 // pred_region
        _
      $region24: #{tpu_custom_call.1} parent=11 // pred_fallthru
        _
      // Predicated region
      $region25: #{tpu_custom_call.1} parent=11 // pred_check
        %p171 = pneg %p121
      $region26: #{tpu_custom_call.1} parent=11 // pred_check_branch
        %173 = sbr.rel (%p171) target = $region28
      $region27: #{tpu_custom_call.1} parent=11 // pred_region
        _
      $region28: #{tpu_custom_call.1} parent=11 // pred_fallthru
        _
    $region12: #{tpu_custom_call.1} parent=5 // pred_fallthru
      _
    %p174 = scmp.lt.s32.totalorder %s11, 2
    // Predicated region
    $region29: #{tpu_custom_call.1} parent=5 // pred_check
      %p175 = pneg %p174
    $region30: #{tpu_custom_call.1} parent=5 // pred_check_branch
      %177 = sbr.rel (%p175) target = $region32
    $region31: #{tpu_custom_call.1} parent=5 // pred_region
      // Predicated region
      $region33: #{tpu_custom_call.1} parent=31 // pred_check
        %p178 = pneg %p31
      $region34: #{tpu_custom_call.1} parent=31 // pred_check_branch
        %180 = sbr.rel (%p178) target = $region36
      $region35: #{tpu_custom_call.1} parent=31 // pred_region
        %s181 = smul.u32 16, %s11
        %p182 = scmp.lt.s32.totalorder %s181, 31
        %s183 = scalar_select %p182, %s181, 31
        %s184 = smul.addr %s183, 8
        %s185 = scalar_lea.vmem %s0, %s184
        %s186 = smul.u32 16, %s11
      $region36: #{tpu_custom_call.1} parent=31 // pred_fallthru
        _
    $region32: #{tpu_custom_call.1} parent=5 // pred_fallthru
      _
    %p187 = scmp.le.s32.totalorder 1, %s11
    %p188 = scmp.lt.s32.totalorder %s11, 3
    %p189 = pnand %p187, %p188
    %p190 = pneg %p189
    // Predicated region
    $region37: #{tpu_custom_call.1} parent=5 // pred_check
      _
    $region38: #{tpu_custom_call.1} parent=5 // pred_check_branch
      %192 = sbr.rel (%p189) target = $region40
    $region39: #{tpu_custom_call.1} parent=5 // pred_region
      %s193 = ssub.s32 %s11, 1
      %s194 = smul.u32 16, %s16
      %p195 = scmp.lt.s32.totalorder %s194, 31
      %s196 = scalar_select %p195, %s194, 31
      %s197 = smul.addr %s196, 8
      %s198 = scalar_lea.vmem %s0, %s197
      %p199 = pneg %p37
      %p200 = pneg %p34
      %p201 = pneg %p58
      %p202 = pneg %p55
      %p203 = pneg %p79
      %p204 = pneg %p76
      %p205 = pneg %p100
      %p206 = pneg %p97
      %p207 = pneg %p121
      %p208 = pneg %p118
      %p209 = pneg %p147
      %p210 = pneg %p144
      %s211 = smul.u32 16, %s16
      %p212 = scmp.lt.s32.totalorder %s211, 31
      %s213 = scalar_select %p212, %s211, 31
      %s214 = smul.addr %s213, 8
      %s215 = scalar_lea.vmem %s5, %s214
      %s216 = smul.u32 16, %s16
      %p217 = scmp.lt.s32.totalorder %s216, 31
      %s218 = scalar_select %p217, %s216, 31
      %s219 = smul.addr %s218, 8
      %s220 = scalar_lea.vmem %s0, %s219
      %s221 = smul.u32 16, %s16
      %s222 = smul.u32 16, %s16
      %p223 = scmp.lt.s32.totalorder %s222, 31
      %s224 = scalar_select %p223, %s222, 31
      %s225 = smul.addr %s224, 8
      %s226 = scalar_lea.vmem %s5, %s225
      %s227 = smul.u32 16, %s16
      %v229 = vld [vmem:[%s220] sm:$0xff]
      %v230 = vld [vmem:[%s220 + $0x8] sm:$0xff]
      %v231 = vld [vmem:[%s220 + $0x10] sm:$0xff]
      %v232 = vld [vmem:[%s220 + $0x18] sm:$0xff]
      %v233 = vld [vmem:[%s220 + $0x20] sm:$0xff]
      %v234 = vld [vmem:[%s220 + $0x28] sm:$0xff]
      %v235 = vld [vmem:[%s220 + $0x30] sm:$0xff]
      %v236 = vld [vmem:[%s220 + $0x38] sm:$0xff]
      %v237 = vld [vmem:[%s220 + $0x40] sm:$0xff]
      %v238 = vld [vmem:[%s220 + $0x48] sm:$0xff]
      %v239 = vld [vmem:[%s220 + $0x50] sm:$0xff]
      %v240 = vld [vmem:[%s220 + $0x58] sm:$0xff]
      %v241 = vld [vmem:[%s220 + $0x60] sm:$0xff]
      %v242 = vld [vmem:[%s220 + $0x68] sm:$0xff]
      %v243 = vld [vmem:[%s220 + $0x70] sm:$0xff]
      %v244 = vld [vmem:[%s220 + $0x78] sm:$0xff]
      %v245 = vpack.c.bf16 %v230, %v229
      %v246 = vpack.c.bf16 %v232, %v231
      %v247 = vpack.c.bf16 %v234, %v233
      %v248 = vpack.c.bf16 %v236, %v235
      %v249 = vpack.c.bf16 %v238, %v237
      %v250 = vpack.c.bf16 %v240, %v239
      %v251 = vpack.c.bf16 %v242, %v241
      %v252 = vpack.c.bf16 %v244, %v243
      %v253 = vld [vmem:[%s1] sm:$0xf]
      %v254 = vld [vmem:[%s1 + $0x4] sm:$0xf]
      %v255 = vld [vmem:[%s1 + $0x8] sm:$0xf]
      %v256 = vld [vmem:[%s1 + $0xc] sm:$0xf]
      %v257 = vld [vmem:[%s2] sm:$0x1]
      %v259 = vperm.slane %v257, 0
      %v265 = vunpack.c.l.b16 %v253
      %v266 = vunpack.c.l.b16 %v254
      %v267 = vunpack.c.l.b16 %v255
      %v268 = vunpack.c.l.b16 %v256
      %v269 = vpack.c.b16 %v266, %v265
      %v270 = vpack.c.b16 %v268, %v267
      %vm273 = vcmask 261120
      %v275 = vsel %vm273, %v245, 0
      %v278 = vsel %vm273, %v246, 0
      %v281 = vsel %vm273, %v247, 0
      %v284 = vsel %vm273, %v248, 0
      %v287 = vsel %vm273, %v249, 0
      %v290 = vsel %vm273, %v250, 0
      %v293 = vsel %vm273, %v251, 0
      %v296 = vsel %vm273, %v252, 0
      %298 = vmatpush.bf16.msra.mxu0 0
      %299 = vmatpush.bf16.msra.mxu0 0
      %300 = vmatpush.bf16.msra.mxu0 0
      %301 = vmatpush.bf16.msra.mxu0 0
      %302 = vmatpush.bf16.msra.mxu0 0
      %303 = vmatpush.bf16.msra.mxu0 0
      %304 = vmatpush.bf16.msra.mxu0 %v270
      %305 = vmatpush.bf16.msra.mxu0 %v269
      %306 = vmatmul.bf16.gmra.mxu0 %v275
      %v307 = vpop.f32.mrf.mxu0
      %v308 = vadd.f32 %v259, %v307
      %v309 = vpop.f32.mrf.mxu0
      %v310 = vadd.f32 %v259, %v309
      %311 = vmatmul.bf16.gmra.mxu0 %v278
      %v312 = vpop.f32.mrf.mxu0
      %v313 = vadd.f32 %v259, %v312
      %v314 = vpop.f32.mrf.mxu0
      %v315 = vadd.f32 %v259, %v314
      %316 = vmatmul.bf16.gmra.mxu0 %v281
      %v317 = vpop.f32.mrf.mxu0
      %v318 = vadd.f32 %v259, %v317
      %v319 = vpop.f32.mrf.mxu0
      %v320 = vadd.f32 %v259, %v319
      %321 = vmatmul.bf16.gmra.mxu0 %v284
      %v322 = vpop.f32.mrf.mxu0
      %v323 = vadd.f32 %v259, %v322
      %v324 = vpop.f32.mrf.mxu0
      %v325 = vadd.f32 %v259, %v324
      %326 = vmatmul.bf16.gmra.mxu0 %v287
      %v327 = vpop.f32.mrf.mxu0
      %v328 = vadd.f32 %v259, %v327
      %v329 = vpop.f32.mrf.mxu0
      %v330 = vadd.f32 %v259, %v329
      %331 = vmatmul.bf16.gmra.mxu0 %v290
      %v332 = vpop.f32.mrf.mxu0
      %v333 = vadd.f32 %v259, %v332
      %v334 = vpop.f32.mrf.mxu0
      %v335 = vadd.f32 %v259, %v334
      %336 = vmatmul.bf16.gmra.mxu0 %v293
      %v337 = vpop.f32.mrf.mxu0
      %v338 = vadd.f32 %v259, %v337
      %v339 = vpop.f32.mrf.mxu0
      %v340 = vadd.f32 %v259, %v339
      %341 = vmatmul.bf16.gmra.mxu0 %v296
      %v342 = vpop.f32.mrf.mxu0
      %v343 = vadd.f32 %v259, %v342
      %v344 = vpop.f32.mrf.mxu0
      %v345 = vadd.f32 %v259, %v344
      %346 = vdwg.mxu0
      %v347 = vmul.f32 %v308, %v308
      %v348 = vmul.f32 %v310, %v310
      %v349 = vmul.f32 %v313, %v313
      %v350 = vmul.f32 %v315, %v315
      %v351 = vmul.f32 %v318, %v318
      %v352 = vmul.f32 %v320, %v320
      %v353 = vmul.f32 %v323, %v323
      %v354 = vmul.f32 %v325, %v325
      %v355 = vmul.f32 %v328, %v328
      %v356 = vmul.f32 %v330, %v330
      %v357 = vmul.f32 %v333, %v333
      %v358 = vmul.f32 %v335, %v335
      %v359 = vmul.f32 %v338, %v338
      %v360 = vmul.f32 %v340, %v340
      %v361 = vmul.f32 %v343, %v343
      %v362 = vmul.f32 %v345, %v345
      %v363 = vmul.f32 %v308, %v347
      %v364 = vmul.f32 %v310, %v348
      %v365 = vmul.f32 %v313, %v349
      %v366 = vmul.f32 %v315, %v350
      %v367 = vmul.f32 %v318, %v351
      %v368 = vmul.f32 %v320, %v352
      %v369 = vmul.f32 %v323, %v353
      %v370 = vmul.f32 %v325, %v354
      %v371 = vmul.f32 %v328, %v355
      %v372 = vmul.f32 %v330, %v356
      %v373 = vmul.f32 %v333, %v357
      %v374 = vmul.f32 %v335, %v358
      %v375 = vmul.f32 %v338, %v359
      %v376 = vmul.f32 %v340, %v360
      %v377 = vmul.f32 %v343, %v361
      %v378 = vmul.f32 %v345, %v362
      %v379 = vmul.f32 %v363, 0.044715
      %v380 = vmul.f32 %v364, 0.044715
      %v381 = vmul.f32 %v365, 0.044715
      %v382 = vmul.f32 %v366, 0.044715
      %v383 = vmul.f32 %v367, 0.044715
      %v384 = vmul.f32 %v368, 0.044715
      %v385 = vmul.f32 %v369, 0.044715
      %v386 = vmul.f32 %v370, 0.044715
      %v387 = vmul.f32 %v371, 0.044715
      %v388 = vmul.f32 %v372, 0.044715
      %v389 = vmul.f32 %v373, 0.044715
      %v390 = vmul.f32 %v374, 0.044715
      %v391 = vmul.f32 %v375, 0.044715
      %v392 = vmul.f32 %v376, 0.044715
      %v393 = vmul.f32 %v377, 0.044715
      %v394 = vmul.f32 %v378, 0.044715
      %v395 = vadd.f32 %v308, %v379
      %v396 = vadd.f32 %v310, %v380
      %v397 = vadd.f32 %v313, %v381
      %v398 = vadd.f32 %v315, %v382
      %v399 = vadd.f32 %v318, %v383
      %v400 = vadd.f32 %v320, %v384
      %v401 = vadd.f32 %v323, %v385
      %v402 = vadd.f32 %v325, %v386
      %v403 = vadd.f32 %v328, %v387
      %v404 = vadd.f32 %v330, %v388
      %v405 = vadd.f32 %v333, %v389
      %v406 = vadd.f32 %v335, %v390
      %v407 = vadd.f32 %v338, %v391
      %v408 = vadd.f32 %v340, %v392
      %v409 = vadd.f32 %v343, %v393
      %v410 = vadd.f32 %v345, %v394
      %v411 = vmul.f32 %v395, 0.7978846
      %v412 = vmul.f32 %v396, 0.7978846
      %v413 = vmul.f32 %v397, 0.7978846
      %v414 = vmul.f32 %v398, 0.7978846
      %v415 = vmul.f32 %v399, 0.7978846
      %v416 = vmul.f32 %v400, 0.7978846
      %v417 = vmul.f32 %v401, 0.7978846
      %v418 = vmul.f32 %v402, 0.7978846
      %v419 = vmul.f32 %v403, 0.7978846
      %v420 = vmul.f32 %v404, 0.7978846
      %v421 = vmul.f32 %v405, 0.7978846
      %v422 = vmul.f32 %v406, 0.7978846
      %v423 = vmul.f32 %v407, 0.7978846
      %v424 = vmul.f32 %v408, 0.7978846
      %v425 = vmul.f32 %v409, 0.7978846
      %v426 = vmul.f32 %v410, 0.7978846
      %v427 = vtanh.pop %v411
      %v428 = vtanh.pop %v412
      %v429 = vtanh.pop %v413
      %v430 = vtanh.pop %v414
      %v431 = vtanh.pop %v415
      %v432 = vtanh.pop %v416
      %v433 = vtanh.pop %v417
      %v434 = vtanh.pop %v418
      %v435 = vtanh.pop %v419
      %v436 = vtanh.pop %v420
      %v437 = vtanh.pop %v421
      %v438 = vtanh.pop %v422
      %v439 = vtanh.pop %v423
      %v440 = vtanh.pop %v424
      %v441 = vtanh.pop %v425
      %v442 = vtanh.pop %v426
      %v443 = vadd.f32 %v427, 1.0
      %v444 = vadd.f32 %v428, 1.0
      %v445 = vadd.f32 %v429, 1.0
      %v446 = vadd.f32 %v430, 1.0
      %v447 = vadd.f32 %v431, 1.0
      %v448 = vadd.f32 %v432, 1.0
      %v449 = vadd.f32 %v433, 1.0
      %v450 = vadd.f32 %v434, 1.0
      %v451 = vadd.f32 %v435, 1.0
      %v452 = vadd.f32 %v436, 1.0
      %v453 = vadd.f32 %v437, 1.0
      %v454 = vadd.f32 %v438, 1.0
      %v455 = vadd.f32 %v439, 1.0
      %v456 = vadd.f32 %v440, 1.0
      %v457 = vadd.f32 %v441, 1.0
      %v458 = vadd.f32 %v442, 1.0
      %v459 = vmul.f32 %v443, 0.5
      %v460 = vmul.f32 %v444, 0.5
      %v461 = vmul.f32 %v445, 0.5
      %v462 = vmul.f32 %v446, 0.5
      %v463 = vmul.f32 %v447, 0.5
      %v464 = vmul.f32 %v448, 0.5
      %v465 = vmul.f32 %v449, 0.5
      %v466 = vmul.f32 %v450, 0.5
      %v467 = vmul.f32 %v451, 0.5
      %v468 = vmul.f32 %v452, 0.5
      %v469 = vmul.f32 %v453, 0.5
      %v470 = vmul.f32 %v454, 0.5
      %v471 = vmul.f32 %v455, 0.5
      %v472 = vmul.f32 %v456, 0.5
      %v473 = vmul.f32 %v457, 0.5
      %v474 = vmul.f32 %v458, 0.5
      %v475 = vmul.f32 %v308, %v459
      %v476 = vmul.f32 %v310, %v460
      %v477 = vmul.f32 %v313, %v461
      %v478 = vmul.f32 %v315, %v462
      %v479 = vmul.f32 %v318, %v463
      %v480 = vmul.f32 %v320, %v464
      %v481 = vmul.f32 %v323, %v465
      %v482 = vmul.f32 %v325, %v466
      %v483 = vmul.f32 %v328, %v467
      %v484 = vmul.f32 %v330, %v468
      %v485 = vmul.f32 %v333, %v469
      %v486 = vmul.f32 %v335, %v470
      %v487 = vmul.f32 %v338, %v471
      %v488 = vmul.f32 %v340, %v472
      %v489 = vmul.f32 %v343, %v473
      %v490 = vmul.f32 %v345, %v474
      %v491 = vpack.c.bf16 %v476, %v475
      %v492 = vpack.c.bf16 %v478, %v477
      %v493 = vpack.c.bf16 %v480, %v479
      %v494 = vpack.c.bf16 %v482, %v481
      %v495 = vpack.c.bf16 %v484, %v483
      %v496 = vpack.c.bf16 %v486, %v485
      %v497 = vpack.c.bf16 %v488, %v487
      %v498 = vpack.c.bf16 %v490, %v489
      %v499 = vld [vmem:[%s3] sm:$0xf]
      %v500 = vld [vmem:[%s3 + $0x4] sm:$0xf]
      %v501 = vld [vmem:[%s3 + $0x8] sm:$0xf]
      %v502 = vld [vmem:[%s3 + $0xc] sm:$0xf]
      %v503 = vld [vmem:[%s3 + $0x10] sm:$0xf]
      %v504 = vld [vmem:[%s3 + $0x14] sm:$0xf]
      %v505 = vld [vmem:[%s3 + $0x18] sm:$0xf]
      %v506 = vld [vmem:[%s3 + $0x1c] sm:$0xf]
      %v507 = vld [vmem:[%s3 + $0x20] sm:$0xf]
      %v508 = vld [vmem:[%s3 + $0x24] sm:$0xf]
      %v509 = vld [vmem:[%s3 + $0x28] sm:$0xf]
      %v510 = vld [vmem:[%s3 + $0x2c] sm:$0xf]
      %v511 = vld [vmem:[%s3 + $0x30] sm:$0xf]
      %v512 = vld [vmem:[%s3 + $0x34] sm:$0xf]
      %v513 = vld [vmem:[%s3 + $0x38] sm:$0xf]
      %v514 = vld [vmem:[%s3 + $0x3c] sm:$0xf]
      %v515 = vld [vmem:[%s4] sm:$0x1]
      %v517 = vperm.slane %v515, 0
      %v535 = vunpack.c.l.b16 %v499
      %v536 = vunpack.c.l.b16 %v500
      %v537 = vunpack.c.l.b16 %v501
      %v538 = vunpack.c.l.b16 %v502
      %v539 = vunpack.c.l.b16 %v503
      %v540 = vunpack.c.l.b16 %v504
      %v541 = vunpack.c.l.b16 %v505
      %v542 = vunpack.c.l.b16 %v506
      %v543 = vunpack.c.l.b16 %v507
      %v544 = vunpack.c.l.b16 %v508
      %v545 = vunpack.c.l.b16 %v509
      %v546 = vunpack.c.l.b16 %v510
      %v547 = vunpack.c.l.b16 %v511
      %v548 = vunpack.c.l.b16 %v512
      %v549 = vunpack.c.l.b16 %v513
      %v550 = vunpack.c.l.b16 %v514
      %v551 = vpack.c.b16 %v536, %v535
      %v552 = vpack.c.b16 %v538, %v537
      %v553 = vpack.c.b16 %v540, %v539
      %v554 = vpack.c.b16 %v542, %v541
      %v555 = vpack.c.b16 %v544, %v543
      %v556 = vpack.c.b16 %v546, %v545
      %v557 = vpack.c.b16 %v548, %v547
      %v558 = vpack.c.b16 %v550, %v549
      %567 = vmatpush.bf16.msra.mxu0 %v558
      %568 = vmatpush.bf16.msra.mxu0 %v557
      %569 = vmatpush.bf16.msra.mxu0 %v556
      %570 = vmatpush.bf16.msra.mxu0 %v555
      %571 = vmatpush.bf16.msra.mxu0 %v554
      %572 = vmatpush.bf16.msra.mxu0 %v553
      %573 = vmatpush.bf16.msra.mxu0 %v552
      %574 = vmatpush.bf16.msra.mxu0 %v551
      %575 = vmatmul.bf16.gmra.mxu0 %v491
      %v576 = vpop.f32.mrf.mxu0
      %v577 = vadd.f32 %v517, %v576
      %v578 = vpop.f32.mrf.mxu0
      %v579 = vadd.f32 %v517, %v578
      %580 = vmatmul.bf16.gmra.mxu0 %v492
      %v581 = vpop.f32.mrf.mxu0
      %v582 = vadd.f32 %v517, %v581
      %v583 = vpop.f32.mrf.mxu0
      %v584 = vadd.f32 %v517, %v583
      %585 = vmatmul.bf16.gmra.mxu0 %v493
      %v586 = vpop.f32.mrf.mxu0
      %v587 = vadd.f32 %v517, %v586
      %v588 = vpop.f32.mrf.mxu0
      %v589 = vadd.f32 %v517, %v588
      %590 = vmatmul.bf16.gmra.mxu0 %v494
      %v591 = vpop.f32.mrf.mxu0
      %v592 = vadd.f32 %v517, %v591
      %v593 = vpop.f32.mrf.mxu0
      %v594 = vadd.f32 %v517, %v593
      %595 = vmatmul.bf16.gmra.mxu0 %v495
      %v596 = vpop.f32.mrf.mxu0
      %v597 = vadd.f32 %v517, %v596
      %v598 = vpop.f32.mrf.mxu0
      %v599 = vadd.f32 %v517, %v598
      %600 = vmatmul.bf16.gmra.mxu0 %v496
      %v601 = vpop.f32.mrf.mxu0
      %v602 = vadd.f32 %v517, %v601
      %v603 = vpop.f32.mrf.mxu0
      %v604 = vadd.f32 %v517, %v603
      %605 = vmatmul.bf16.gmra.mxu0 %v497
      %v606 = vpop.f32.mrf.mxu0
      %v607 = vadd.f32 %v517, %v606
      %v608 = vpop.f32.mrf.mxu0
      %v609 = vadd.f32 %v517, %v608
      %610 = vmatmul.bf16.gmra.mxu0 %v498
      %v611 = vpop.f32.mrf.mxu0
      %v612 = vadd.f32 %v517, %v611
      %v613 = vpop.f32.mrf.mxu0
      %v614 = vadd.f32 %v517, %v613
      %615 = vdwg.mxu0
      %616 = vst.msk [vmem:[%s226] sm:$0xff] %vm273, %v577
      %617 = vst.msk [vmem:[%s226 + $0x8] sm:$0xff] %vm273, %v579
      %618 = vst.msk [vmem:[%s226 + $0x10] sm:$0xff] %vm273, %v582
      %619 = vst.msk [vmem:[%s226 + $0x18] sm:$0xff] %vm273, %v584
      %620 = vst.msk [vmem:[%s226 + $0x20] sm:$0xff] %vm273, %v587
      %621 = vst.msk [vmem:[%s226 + $0x28] sm:$0xff] %vm273, %v589
      %622 = vst.msk [vmem:[%s226 + $0x30] sm:$0xff] %vm273, %v592
      %623 = vst.msk [vmem:[%s226 + $0x38] sm:$0xff] %vm273, %v594
      %624 = vst.msk [vmem:[%s226 + $0x40] sm:$0xff] %vm273, %v597
      %625 = vst.msk [vmem:[%s226 + $0x48] sm:$0xff] %vm273, %v599
      %626 = vst.msk [vmem:[%s226 + $0x50] sm:$0xff] %vm273, %v602
      %627 = vst.msk [vmem:[%s226 + $0x58] sm:$0xff] %vm273, %v604
      %628 = vst.msk [vmem:[%s226 + $0x60] sm:$0xff] %vm273, %v607
      %629 = vst.msk [vmem:[%s226 + $0x68] sm:$0xff] %vm273, %v609
      %630 = vst.msk [vmem:[%s226 + $0x70] sm:$0xff] %vm273, %v612
      %631 = vst.msk [vmem:[%s226 + $0x78] sm:$0xff] %vm273, %v614
      %s632 = smul.u32 16, %s16
      %p633 = scmp.lt.s32.totalorder %s632, 31
      %s634 = scalar_select %p633, %s632, 31
      %s635 = smul.addr %s634, 8
      %s636 = scalar_lea.vmem %s5, %s635
      // Predicated region
      $region41: #{tpu_custom_call.1} parent=39 // pred_check
        %p637 = pneg %p144
      $region42: #{tpu_custom_call.1} parent=39 // pred_check_branch
        %639 = sbr.rel (%p637) target = $region44
      $region43: #{tpu_custom_call.1} parent=39 // pred_region
        %s640 = smul.u32 16, %s16
      $region44: #{tpu_custom_call.1} parent=39 // pred_fallthru
        _
    $region40: #{tpu_custom_call.1} parent=5 // pred_fallthru
      _
    %p641 = scmp.le.s32.totalorder 2, %s11
    // Predicated region
    $region45: #{tpu_custom_call.1} parent=5 // pred_check
      %p642 = pneg %p641
    $region46: #{tpu_custom_call.1} parent=5 // pred_check_branch
      %644 = sbr.rel (%p642) target = $region48
    $region47: #{tpu_custom_call.1} parent=5 // pred_region
      %s645 = ssub.s32 %s11, 2
      // Predicated region
      $region49: #{tpu_custom_call.1} parent=47 // pred_check
        %p646 = pneg %p150
      $region50: #{tpu_custom_call.1} parent=47 // pred_check_branch
        %648 = sbr.rel (%p646) target = $region52
      $region51: #{tpu_custom_call.1} parent=47 // pred_region
        %s649 = smul.u32 16, %s17
        %p650 = scmp.lt.s32.totalorder %s649, 31
        %s651 = scalar_select %p650, %s649, 31
        %s652 = smul.addr %s651, 8
        %s653 = scalar_lea.vmem %s5, %s652
      $region52: #{tpu_custom_call.1} parent=47 // pred_fallthru
        _
    $region48: #{tpu_custom_call.1} parent=5 // pred_fallthru
      _
  $region6: #{tpu_custom_call.1} parent=0 // loop_footer
    %s15 = sadd.s32 1, %s11
  $region7: #{tpu_custom_call.1} parent=0 // loop_footer_branch
    %10 = sbr.rel target = $region3
  $region8: #{tpu_custom_call.1} parent=0 // loop_exit
    _

</llo_original>
